<compile_context>
chip_gen: v6e
topology: v6e:2x2x1
jax: 0.10.0
libtpu: 0.0.40
codegen_flags: <defaults>
</compile_context>

<pallas_src>
import functools
import math

import jax
import jax.numpy as jnp
from jax import lax
from jax.experimental import pallas as pl
from jax.experimental.pallas import tpu as pltpu


# ---- tiling budgets (conservative across v5e / v6e / v7x) -------------------
_TARGET_BLOCK_BYTES = 8 * 1024 * 1024    # per (1 x tr x tp) input slice
_VMEM_BUDGET_BYTES = 20 * 1024 * 1024    # per-step VMEM incl. double buffers
_MAX_LANE_TILE = 4096                    # post tile (multiple of 128)
_MAX_LAST_RED_TILE = 8192                # red tile when reducing the last axis
_VMEM_LIMIT_BYTES = 32 * 1024 * 1024     # scoped VMEM limit handed to Mosaic
_SPLIT_1D_MIN_BYTES = 4 * 1024 * 1024    # min size to two-phase a 1-D reduction


def _sublane_multiple(itemsize):
    # Native sublane packing: 8 rows for 32-bit, 16 for 16-bit, 32 for 8-bit.
    return max(8, 32 // int(itemsize))


def _acc_and_out_dtype(dtype):
    """Accumulation dtype and output dtype for a given input dtype."""
    if jnp.issubdtype(dtype, jnp.floating):
        return jnp.float32, dtype          # f32 accumulate, keep input dtype out
    if dtype == jnp.dtype(jnp.bool_):
        # TODO(synk): torch.sum promotes bool/int to int64; with JAX x64 off we
        # accumulate and return int32/uint32 instead.
        return jnp.int32, jnp.int32
    if jnp.issubdtype(dtype, jnp.signedinteger):
        d = jnp.promote_types(dtype, jnp.int32)
        return d, d
    if jnp.issubdtype(dtype, jnp.unsignedinteger):
        d = jnp.promote_types(dtype, jnp.uint32)
        return d, d
    return dtype, dtype


# -----------------------------------------------------------------------------
# Kernel A: reduce the middle axis of a (bp, tr, tp) block.
# Grid = (pre_blocks, post_blocks, red_blocks); red is innermost + "arbitrary".
# -----------------------------------------------------------------------------
def _sum_mid_kernel(x_ref, o_ref, acc_ref, *, red, tr, acc_dt, mask_red):
    k = pl.program_id(2)
    last = pl.num_programs(2) - 1

    @pl.when(k == 0)
    def _init():
        acc_ref[...] = jnp.zeros_like(acc_ref)

    def _accumulate(apply_mask):
        x = x_ref[...].astype(acc_dt)
        if apply_mask:
            rows = k * tr + lax.broadcasted_iota(jnp.int32, x.shape, 1)
            x = jnp.where(rows < red, x, jnp.zeros_like(x))
        acc_ref[...] += jnp.sum(x, axis=1, keepdims=True)

    if mask_red:
        # Only the last red block is partial: keep the hot loop unmasked.
        @pl.when(k < last)
        def _body():
            _accumulate(False)

        @pl.when(k == last)
        def _tail():
            _accumulate(True)
    else:
        _accumulate(False)

    @pl.when(k == last)
    def _finalize():
        o_ref[...] = acc_ref[...].astype(o_ref.dtype)


def _sum_mid_single_kernel(x_ref, o_ref, *, acc_dt):
    # grid_red == 1: write the reduction directly, no scratch accumulator.
    x = x_ref[...].astype(acc_dt)
    o_ref[...] = jnp.sum(x, axis=1, keepdims=True).astype(o_ref.dtype)


def _sum_mid(x3, pre, red, post, acc_dt, itemsize, out_dt):
    sub = _sublane_multiple(itemsize)
    acc_isz = jnp.dtype(acc_dt).itemsize
    out_isz = jnp.dtype(out_dt).itemsize

    # ---- post (lane) tile: multiple of 128, or the full dim -----------------
    tp = post if post <= _MAX_LANE_TILE else _MAX_LANE_TILE
    grid_post = pl.cdiv(post, tp)

    # ---- red (sublane) tile: full dim if it fits, else dtype-native multiple -
    if red * tp * itemsize <= _TARGET_BLOCK_BYTES:
        tr = red
    else:
        tr = max((_TARGET_BLOCK_BYTES // (tp * itemsize)) // sub * sub, sub)
    grid_red = pl.cdiv(red, tr)
    mask_red = (red % tr) != 0

    # ---- fold pre rows per block to amortize per-step overhead --------------
    per_bp = (tr * tp * itemsize * 2            # input, double buffered
              + 8 * tp * out_isz * 2            # output block (sublane-padded)
              + 8 * tp * acc_isz)               # accumulator scratch
    bp = max(1, min(pre, _VMEM_BUDGET_BYTES // per_bp))
    grid_pre = pl.cdiv(pre, bp)

    # Megacore (v7x): make sure there are >= 2 parallel blocks when non-trivial.
    total_bytes = pre * red * post * itemsize
    if grid_pre == 1 and grid_post == 1 and total_bytes > (1 << 20):
        if pre > 1:
            bp = pl.cdiv(pre, 2)
            grid_pre = pl.cdiv(pre, bp)
        elif post >= 256:
            tp = max(128, (post // 2) // 128 * 128)
            grid_post = pl.cdiv(post, tp)

    if grid_red == 1 and not mask_red:
        kernel = functools.partial(_sum_mid_single_kernel, acc_dt=acc_dt)
        scratch = []
    else:
        kernel = functools.partial(
            _sum_mid_kernel, red=red, tr=tr, acc_dt=acc_dt, mask_red=mask_red)
        scratch = [pltpu.VMEM((bp, 1, tp), acc_dt)]

    bytes_accessed = total_bytes + pre * post * out_isz
    return pl.pallas_call(
        kernel,
        out_shape=jax.ShapeDtypeStruct((pre, 1, post), out_dt),
        grid_spec=pltpu.PrefetchScalarGridSpec(
            num_scalar_prefetch=0,
            grid=(grid_pre, grid_post, grid_red),
            in_specs=[pl.BlockSpec((bp, tr, tp), lambda i, j, k: (i, k, j))],
            out_specs=pl.BlockSpec((bp, 1, tp), lambda i, j, k: (i, 0, j)),
            scratch_shapes=scratch,
        ),
        compiler_params=pltpu.CompilerParams(
            dimension_semantics=("parallel", "parallel", "arbitrary"),
            vmem_limit_bytes=_VMEM_LIMIT_BYTES,
        ),
        cost_estimate=pl.CostEstimate(
            flops=pre * red * post,
            transcendentals=0,
            bytes_accessed=bytes_accessed,
        ),
    )(x3)


# -----------------------------------------------------------------------------
# Kernel B: reduce the last (lane) axis of a (bp, tr) block (post == 1 case).
# Grid = (pre_blocks, red_blocks); red is innermost + "arbitrary".
# -----------------------------------------------------------------------------
def _sum_last_kernel(x_ref, o_ref, acc_ref, *, red, tr, acc_dt, mask_red):
    k = pl.program_id(1)
    last = pl.num_programs(1) - 1

    @pl.when(k == 0)
    def _init():
        acc_ref[...] = jnp.zeros_like(acc_ref)

    def _accumulate(apply_mask):
        x = x_ref[...].astype(acc_dt)
        if apply_mask:
            cols = k * tr + lax.broadcasted_iota(jnp.int32, x.shape, 1)
            x = jnp.where(cols < red, x, jnp.zeros_like(x))
        acc_ref[...] += jnp.sum(x, axis=-1, keepdims=True)

    if mask_red:
        @pl.when(k < last)
        def _body():
            _accumulate(False)

        @pl.when(k == last)
        def _tail():
            _accumulate(True)
    else:
        _accumulate(False)

    @pl.when(k == last)
    def _finalize():
        o_ref[...] = acc_ref[...].astype(o_ref.dtype)


def _sum_last_single_kernel(x_ref, o_ref, *, acc_dt):
    x = x_ref[...].astype(acc_dt)
    o_ref[...] = jnp.sum(x, axis=-1, keepdims=True).astype(o_ref.dtype)


def _sum_last(x2, pre, red, acc_dt, itemsize, out_dt):
    sub = _sublane_multiple(itemsize)
    acc_isz = jnp.dtype(acc_dt).itemsize
    out_isz = jnp.dtype(out_dt).itemsize

    # ---- red (lane) tile: full dim if small, else multiple of 128 ------------
    tr = red if red <= _MAX_LAST_RED_TILE else _MAX_LAST_RED_TILE
    grid_red = pl.cdiv(red, tr)
    mask_red = (red % tr) != 0

    # ---- fold pre rows; bp must be full pre or a native sublane multiple -----
    per_bp = (tr * itemsize * 2                 # input, double buffered
              + 128 * out_isz * 2               # output block (lane-padded)
              + 128 * acc_isz)                  # accumulator scratch
    bp_cap = max(1, _VMEM_BUDGET_BYTES // per_bp)
    if pre <= bp_cap:
        bp = pre
    else:
        bp = max((bp_cap // sub) * sub, sub)
    grid_pre = pl.cdiv(pre, bp)

    # Megacore (v7x): split pre when the whole problem collapsed to one block.
    total_bytes = pre * red * itemsize
    if grid_pre == 1 and pre >= 2 * sub and total_bytes > (1 << 20):
        half = ((pl.cdiv(pre, 2) + sub - 1) // sub) * sub
        if half < pre:
            bp = half
            grid_pre = pl.cdiv(pre, bp)

    if grid_red == 1 and not mask_red:
        kernel = functools.partial(_sum_last_single_kernel, acc_dt=acc_dt)
        scratch = []
    else:
        kernel = functools.partial(
            _sum_last_kernel, red=red, tr=tr, acc_dt=acc_dt, mask_red=mask_red)
        scratch = [pltpu.VMEM((bp, 1), acc_dt)]

    bytes_accessed = total_bytes + pre * out_isz
    return pl.pallas_call(
        kernel,
        out_shape=jax.ShapeDtypeStruct((pre, 1), out_dt),
        grid_spec=pltpu.PrefetchScalarGridSpec(
            num_scalar_prefetch=0,
            grid=(grid_pre, grid_red),
            in_specs=[pl.BlockSpec((bp, tr), lambda i, k: (i, k))],
            out_specs=pl.BlockSpec((bp, 1), lambda i, k: (i, 0)),
            scratch_shapes=scratch,
        ),
        compiler_params=pltpu.CompilerParams(
            dimension_semantics=("parallel", "arbitrary"),
            vmem_limit_bytes=_VMEM_LIMIT_BYTES,
        ),
        cost_estimate=pl.CostEstimate(
            flops=pre * red,
            transcendentals=0,
            bytes_accessed=bytes_accessed,
        ),
    )(x2)


# -----------------------------------------------------------------------------
# Public wrapper: torch.sum(x, dim=dim, keepdim=True)
# -----------------------------------------------------------------------------
def sum_reduce_keepdim(x: jax.Array, dim: int) -> jax.Array:
    nd = x.ndim
    dim = dim % nd
    shape = x.shape

    pre = math.prod(shape[:dim]) if dim > 0 else 1
    red = shape[dim]
    post = math.prod(shape[dim + 1:]) if dim < nd - 1 else 1

    out_shape_full = shape[:dim] + (1,) + shape[dim + 1:]

    acc_dt, out_dt = _acc_and_out_dtype(x.dtype)
    if x.dtype == jnp.dtype(jnp.bool_):
        x = x.astype(jnp.int32)
    itemsize = jnp.dtype(x.dtype).itemsize

    if red == 1:
        return x.reshape(out_shape_full).astype(out_dt)

    if post > 1:
        out = _sum_mid(x.reshape(pre, red, post), pre, red, post,
                       acc_dt, itemsize, out_dt)
        return out.reshape(out_shape_full)

    # post == 1: last-axis (lane) reduction.
    x2 = x.reshape(pre, red)
    total_bytes = pre * red * itemsize
    split = 2 * _sublane_multiple(itemsize)     # two-phase split factor
    if (pre < 8 and red % split == 0 and red // split >= 256
            and total_bytes >= _SPLIT_1D_MIN_BYTES):
        # v7x megacore coverage for (nearly) 1-D reductions: a contiguous
        # row-major reshape splits each row into `split` sub-rows, giving the
        # grid a real parallel axis; partials are combined with a tiny jnp sum.
        part = _sum_last(x2.reshape(pre * split, red // split),
                         pre * split, red // split, acc_dt, itemsize, acc_dt)
        out = jnp.sum(part.reshape(pre, split), axis=-1,
                      keepdims=True).astype(out_dt)
    else:
        out = _sum_last(x2, pre, red, acc_dt, itemsize, out_dt)
    return out.reshape(out_shape_full)


if __name__ == "__main__":
    key = jax.random.PRNGKey(0)
    B, D1, D2 = 2, 64, 128
    x = jax.random.normal(key, (B, D1, D2), dtype=jnp.float32)

    # dim = 1 (the module's default case): middle-axis reduction
    out1 = jax.block_until_ready(sum_reduce_keepdim(x, 1))
    ref1 = jnp.sum(x, axis=1, keepdims=True)
    assert out1.shape == ref1.shape, (out1.shape, ref1.shape)
    assert jnp.allclose(out1, ref1, atol=1e-4, rtol=1e-5)

    # dim = 2 (last-axis, lane-dense path)
    out2 = jax.block_until_ready(sum_reduce_keepdim(x, 2))
    ref2 = jnp.sum(x, axis=2, keepdims=True)
    assert out2.shape == ref2.shape, (out2.shape, ref2.shape)
    assert jnp.allclose(out2, ref2, atol=1e-4, rtol=1e-5)

    # dim = 0 (pre == 1 path)
    out0 = jax.block_until_ready(sum_reduce_keepdim(x, 0))
    ref0 = jnp.sum(x, axis=0, keepdims=True)
    assert out0.shape == ref0.shape, (out0.shape, ref0.shape)
    assert jnp.allclose(out0, ref0, atol=1e-4, rtol=1e-5)

    # bfloat16 input: kernel accumulates in f32, casts on final store
    xb = x.astype(jnp.bfloat16)
    outb = jax.block_until_ready(sum_reduce_keepdim(xb, 1))
    refb = jnp.sum(xb.astype(jnp.float32), axis=1, keepdims=True)
    assert outb.shape == refb.shape
    assert jnp.allclose(outb.astype(jnp.float32), refb, atol=2e-1, rtol=2e-2)

    # Exercise the multi-block (accumulator + tail-mask) and 1-D split code
    # paths with SMALL shapes by temporarily shrinking the tile budgets.
    _saved = (_TARGET_BLOCK_BYTES, _VMEM_BUDGET_BYTES,
              _MAX_LANE_TILE, _MAX_LAST_RED_TILE, _SPLIT_1D_MIN_BYTES)
    _TARGET_BLOCK_BYTES = 16 * 1024
    _VMEM_BUDGET_BYTES = 256 * 1024
    _MAX_LANE_TILE = 128
    _MAX_LAST_RED_TILE = 128
    _SPLIT_1D_MIN_BYTES = 1024

    xm = jax.random.normal(jax.random.PRNGKey(1), (4, 200, 256), jnp.float32)
    outm = jax.block_until_ready(sum_reduce_keepdim(xm, 1))
    assert jnp.allclose(outm, jnp.sum(xm, axis=1, keepdims=True),
                        atol=1e-3, rtol=1e-5)

    xl = jax.random.normal(jax.random.PRNGKey(2), (16, 200), jnp.float32)
    outl = jax.block_until_ready(sum_reduce_keepdim(xl, 1))
    assert jnp.allclose(outl, jnp.sum(xl, axis=1, keepdims=True),
                        atol=1e-3, rtol=1e-5)

    xv = jax.random.normal(jax.random.PRNGKey(3), (4096,), jnp.float32)
    outv = jax.block_until_ready(sum_reduce_keepdim(xv, 0))
    assert outv.shape == (1,)
    assert jnp.allclose(outv, jnp.sum(xv, axis=0, keepdims=True),
                        atol=1e-2, rtol=1e-5)

    (_TARGET_BLOCK_BYTES, _VMEM_BUDGET_BYTES,
     _MAX_LANE_TILE, _MAX_LAST_RED_TILE, _SPLIT_1D_MIN_BYTES) = _saved

    print("KERNEL_OK")
</pallas_src>

<mosaic_0001>
module attributes {stable_mosaic.version = 11 : i64} {
  func.func @_sum_mid_single_kernel(%arg0: i32, %arg1: i32, %arg2: i32, %arg3: memref<2x64x128xf32, #tpu.memory_space<vmem>>, %arg4: memref<2x1x128xf32, #tpu.memory_space<vmem>>) attributes {dimension_semantics = [#tpu.dimension_semantics<parallel>, #tpu.dimension_semantics<parallel>, #tpu.dimension_semantics<arbitrary>], iteration_bounds = array<i64: 1, 1, 1>, scalar_prefetch = 0 : i64, scratch_operands = 0 : i64, tpu.core_type = #tpu.core_type<tc>, window_params = [{transform_indices = @transform_0, window_bounds = array<i64: 2, 64, 128>}, {transform_indices = @transform_1, window_bounds = array<i64: 2, 1, 128>}]} {
    %c0 = arith.constant 0 : index
    %c0_0 = arith.constant 0 : index
    %c0_1 = arith.constant 0 : index
    %0 = vector.load %arg3[%c0, %c0_0, %c0_1] : memref<2x64x128xf32, #tpu.memory_space<vmem>>, vector<2x64x128xf32>
    %cst = arith.constant dense<0.000000e+00> : vector<2x128xf32>
    %1 = vector.multi_reduction <add>, %0, %cst [1] : vector<2x64x128xf32> to vector<2x128xf32>
    %2 = vector.shape_cast %1 : vector<2x128xf32> to vector<2x1x128xf32>
    %c0_2 = arith.constant 0 : index
    %c0_3 = arith.constant 0 : index
    %c0_4 = arith.constant 0 : index
    %3 = vector.load %arg4[%c0_2, %c0_3, %c0_4] : memref<2x1x128xf32, #tpu.memory_space<vmem>>, vector<2x1x128xf32>
    tpu.vector_store %arg4[%c0_2, %c0_3, %c0_4], %2 {strides = array<i32>} : memref<2x1x128xf32, #tpu.memory_space<vmem>>, vector<2x1x128xf32>,
    return
  }
  func.func @transform_0(%arg0: i32, %arg1: i32, %arg2: i32) -> (i32, i32, i32) {
    %c0_i32 = arith.constant 0 : i32
    return %arg0, %arg2, %arg1 : i32, i32, i32
  }
  func.func @transform_1(%arg0: i32, %arg1: i32, %arg2: i32) -> (i32, i32, i32) {
    %c0_i32 = arith.constant 0 : i32
    %c0_i32_0 = arith.constant 0 : i32
    return %arg0, %c0_i32, %arg1 : i32, i32, i32
  }
}

</mosaic_0001>

<llo_original>
// kernel: tpu_custom_call.1
$region0: #{tpu_custom_call.1}
  #allocation0 [shape = 'u32[]', space=smem, size = 0x4, offset = 0x4, fixed_abs, tag = 'smem constant byte address 0x4 - core index']
  #allocation1 [shape = 'u32[144,128]{1,0:T(1,128)}', space=vmem, size = 0x12000, scoped, tag = 'internal scratch']
  %s0 = inlined_call_operand.hbm [shape: f32[2,64,128], index: 0, kind: input, shape index: {}]
  %s1 = inlined_call_operand.hbm [shape: f32[2,1,128], index: 1, kind: output, shape index: {}]
  %s2 = sld [smem:[#allocation0]]
  $region18: #{tpu_custom_call.1} parent=0
    _
  %s4 = ssub.s32 1, %s2
  %s5 = scalar_select 0, %s4, %s2
  $region1: #{tpu_custom_call.1} parent=0
    #allocation2 [shape = 'u8[65536]{0}', space=vmem, size = 0x10000, scoped, tag = 'input window, operand 0, single buffered']
    #allocation3 [shape = 's32[1]{0}', space=sflag, size = 0x4, scoped, tag = 'scoped memory for tpu_custom_call.1']
    #allocation4 [shape = 's32[1]{0}', space=sflag, size = 0x4, scoped, tag = 'scoped memory for tpu_custom_call.1']
    #allocation5 [shape = 'u8[1024]{0}', space=vmem, size = 0x400, scoped, tag = 'output window, operand 0, single buffered']
    %6 = vsyncpa [#allocation3], 0
    %7 = vsyncpa [#allocation4], 0
    // Predicated region
    $region2: #{tpu_custom_call.1} parent=1 // pred_check
      _
    $region3: #{tpu_custom_call.1} parent=1 // pred_check_branch
      %9 = sbr.rel (0) target = $region5
    $region4: #{tpu_custom_call.1} parent=1 // pred_region
      %s11 = ssub.s32 2048, 2048
      %12 = vsyncadd [#allocation3], %s11
      %s13 = sshll.u32 [#allocation2], 4
      %s14 = int_to_ptr.vmem [resolvable:$true] %s13
      %19 = dma.hbm_to_vmem [thread:$0]  %s0, 2048, %s14, [#allocation3], 128, 128, 8
    $region5: #{tpu_custom_call.1} parent=1 // pred_fallthru
      _
    // Predicated region
    $region6: #{tpu_custom_call.1} parent=1 // pred_check
      _
    $region7: #{tpu_custom_call.1} parent=1 // pred_check_branch
      %21 = sbr.rel (0) target = $region9
    $region8: #{tpu_custom_call.1} parent=1 // pred_region
      %22 = dma.done [#allocation3], 2048
    $region9: #{tpu_custom_call.1} parent=1 // pred_fallthru
      _
    %v23 = vld [vmem:[#allocation2] sm:$0xff]
    %v24 = vld [vmem:[#allocation2 + $0x8] sm:$0xff]
    %v25 = vld [vmem:[#allocation2 + $0x10] sm:$0xff]
    %v26 = vld [vmem:[#allocation2 + $0x18] sm:$0xff]
    %v27 = vld [vmem:[#allocation2 + $0x20] sm:$0xff]
    %v28 = vld [vmem:[#allocation2 + $0x28] sm:$0xff]
    %v29 = vld [vmem:[#allocation2 + $0x30] sm:$0xff]
    %v30 = vld [vmem:[#allocation2 + $0x38] sm:$0xff]
    %v31 = vld [vmem:[#allocation2 + $0x40] sm:$0xff]
    %v32 = vld [vmem:[#allocation2 + $0x48] sm:$0xff]
    %v33 = vld [vmem:[#allocation2 + $0x50] sm:$0xff]
    %v34 = vld [vmem:[#allocation2 + $0x58] sm:$0xff]
    %v35 = vld [vmem:[#allocation2 + $0x60] sm:$0xff]
    %v36 = vld [vmem:[#allocation2 + $0x68] sm:$0xff]
    %v37 = vld [vmem:[#allocation2 + $0x70] sm:$0xff]
    %v38 = vld [vmem:[#allocation2 + $0x78] sm:$0xff]
    %v39 = vadd.f32 %v23, %v24
    %v40 = vadd.f32 %v39, %v25
    %v41 = vadd.f32 %v40, %v26
    %v42 = vadd.f32 %v41, %v27
    %v43 = vadd.f32 %v42, %v28
    %v44 = vadd.f32 %v43, %v29
    %v45 = vadd.f32 %v44, %v30
    %v46 = vrot.slane %v45, 4
    %v47 = vadd.f32 %v45, %v46
    %v48 = vrot.slane %v47, 2
    %v49 = vadd.f32 %v47, %v48
    %v50 = vrot.slane %v49, 1
    %v51 = vadd.f32 %v49, %v50
    %v52 = vadd.f32 %v31, %v32
    %v53 = vadd.f32 %v52, %v33
    %v54 = vadd.f32 %v53, %v34
    %v55 = vadd.f32 %v54, %v35
    %v56 = vadd.f32 %v55, %v36
    %v57 = vadd.f32 %v56, %v37
    %v58 = vadd.f32 %v57, %v38
    %v59 = vrot.slane %v58, 4
    %v60 = vadd.f32 %v58, %v59
    %v61 = vrot.slane %v60, 2
    %v62 = vadd.f32 %v60, %v61
    %v63 = vrot.slane %v62, 1
    %v64 = vadd.f32 %v62, %v63
    %65 = vst [vmem:[#allocation5] sm:$0x1] %v51
    %66 = vst [vmem:[#allocation5 + $0x1] sm:$0x1] %v64
    // Predicated region
    $region10: #{tpu_custom_call.1} parent=1 // pred_check
      _
    $region11: #{tpu_custom_call.1} parent=1 // pred_check_branch
      %68 = sbr.rel (0) target = $region13
    $region12: #{tpu_custom_call.1} parent=1 // pred_region
      %s70 = ssub.s32 32, 32
      %71 = vsyncadd [#allocation4], %s70
      %s72 = sshll.u32 [#allocation5], 4
      %s73 = int_to_ptr.vmem [resolvable:$true] %s72
      %78 = dma.vmem_to_hbm [thread:$0]  %s73, 32, %s1, [#allocation4], 16, 16, 1
    $region13: #{tpu_custom_call.1} parent=1 // pred_fallthru
      _
    // Predicated region
    $region14: #{tpu_custom_call.1} parent=1 // pred_check
      _
    $region15: #{tpu_custom_call.1} parent=1 // pred_check_branch
      %80 = sbr.rel (0) target = $region17
    $region16: #{tpu_custom_call.1} parent=1 // pred_region
      %81 = dma.done [#allocation4], 32
    $region17: #{tpu_custom_call.1} parent=1 // pred_fallthru
      _
    %82 = vsyncpa [#allocation3], 1
    %83 = vsyncpa [#allocation4], 1

</llo_original>
